<compile_context>
chip_gen: v7x
topology: tpu7x:2x2x1
jax: 0.10.0
libtpu: 0.0.40
codegen_flags: <defaults>
</compile_context>

<pallas_src>
import functools

import jax
import jax.numpy as jnp
from jax import lax
from jax.experimental import pallas as pl
from jax.experimental.pallas import tpu as pltpu


_NEG_LARGE = -1e30                      # fill for padded class columns
_TILE_TARGET_BYTES = 4 * 1024 * 1024    # per-tile logits budget (x2 for double buffer)


def _round_up(x, mult):
    return pl.cdiv(x, mult) * mult


def _ems_loss_kernel(inputs_ref, targets_ref, partial_ref, *, m, n_valid):
    """One row tile: target-scaled cross-entropy partial sum, written lane-dense."""
    pid = pl.program_id(0)

    x = inputs_ref[...].astype(jnp.float32)       # (TM, Cpad) widen in-vreg
    t = targets_ref[...]                          # (TM, 1) int32
    tm, c = x.shape

    # One-hot target mask via iota compare (TPU-friendly form of the scatter loop).
    col_ids = lax.broadcasted_iota(jnp.int32, (tm, c), 1)
    is_target = col_ids == t                      # (TM, Cpad) bool

    # mmatrix: ones everywhere, m at the target column -> inputs_m = x * mmatrix.
    x_m = jnp.where(is_target, x * jnp.float32(m), x)

    # Numerically stable cross entropy with logits.
    row_max = jnp.max(x_m, axis=-1, keepdims=True)                         # (TM, 1)
    lse = row_max + jnp.log(jnp.sum(jnp.exp(x_m - row_max),
                                    axis=-1, keepdims=True))               # (TM, 1)
    target_logit = jnp.sum(jnp.where(is_target, x_m, 0.0),
                           axis=-1, keepdims=True)                         # (TM, 1)
    per_example = lse - target_logit                                       # (TM, 1)

    # Mask batch-padding rows (last tile) out of the sum.
    row_ids = pid * tm + lax.broadcasted_iota(jnp.int32, (tm, 1), 0)
    valid = row_ids < n_valid
    partial = jnp.sum(jnp.where(valid, per_example, 0.0))

    # Lane-dense (1, 8, 128) partial block; wrapper reads [:, 0, 0].
    partial_ref[...] = jnp.full(partial_ref.shape, partial, dtype=jnp.float32)


def ems_loss(inputs, targets, m=4, block_rows=None):
    """inputs: (N, C) float logits (f32 or bf16), targets: (N,) integer class ids."""
    n, c = inputs.shape
    itemsize = jnp.dtype(inputs.dtype).itemsize
    c_pad = _round_up(c, 128)

    # Row-tile size: aim for ~4 MiB of logits per tile, multiple of 8, capped.
    if block_rows is None:
        block_rows = max(8, (_TILE_TARGET_BYTES // (c_pad * itemsize)) // 8 * 8)
        block_rows = min(block_rows, 1024, _round_up(n, 8))
    tm = max(8, _round_up(int(block_rows), 8))
    n_pad = _round_up(n, tm)
    num_tiles = n_pad // tm

    x = inputs                                    # keep original dtype (no f32 upcast)
    if c_pad != c:
        # Padded class columns -> very negative logits: exp() underflows to 0.
        x = jnp.pad(x, ((0, 0), (0, c_pad - c)), constant_values=_NEG_LARGE)
    if n_pad != n:
        x = jnp.pad(x, ((0, n_pad - n), (0, 0)))
    t = targets.astype(jnp.int32).reshape(-1, 1)
    if n_pad != n:
        t = jnp.pad(t, ((0, n_pad - n), (0, 0)))

    cost = pl.CostEstimate(
        flops=4 * n_pad * c_pad,
        transcendentals=n_pad * c_pad,
        bytes_accessed=n_pad * c_pad * itemsize + n_pad * 4 + num_tiles * 8 * 128 * 4,
    )

    partials = pl.pallas_call(
        functools.partial(_ems_loss_kernel, m=m, n_valid=n),
        out_shape=jax.ShapeDtypeStruct((num_tiles, 8, 128), jnp.float32),
        grid=(num_tiles,),
        in_specs=[
            pl.BlockSpec((tm, c_pad), lambda i: (i, 0)),   # logits tile, orig dtype
            pl.BlockSpec((tm, 1), lambda i: (i, 0)),       # targets column
        ],
        out_specs=pl.BlockSpec((1, 8, 128), lambda i: (i, 0, 0)),
        compiler_params=pltpu.CompilerParams(
            dimension_semantics=("parallel",),             # megacore sharding on v7x
        ),
        cost_estimate=cost,
    )(x, t)

    # Final mean over the TRUE batch size, outside the kernel.
    return jnp.sum(partials[:, 0, 0]) / jnp.float32(n)


def _ems_loss_ref(inputs, targets, m=4):
    """Pure-JAX reference mirroring the PyTorch module (sanity check)."""
    n, c = inputs.shape
    one_hot = jax.nn.one_hot(targets, c, dtype=inputs.dtype)
    mmatrix = jnp.ones_like(inputs) + (m - 1.0) * one_hot
    x_m = inputs * mmatrix
    logp = jax.nn.log_softmax(x_m, axis=-1)
    return -jnp.mean(jnp.sum(one_hot * logp, axis=-1))


# TODO(synk): PyTorch CrossEntropyLoss ignore_index (-100) is not modeled; the
# original module never uses it, so all targets are assumed to be valid classes.

if __name__ == "__main__":
    key = jax.random.PRNGKey(0)
    k_in, k_tgt, k_in2, k_tgt2 = jax.random.split(key, 4)

    # Small demo: 12 examples x 100 classes. Exercises C->128 lane padding,
    # batch padding of the last tile, and a 2-step row grid (block_rows=8).
    N, C = 12, 100
    inputs = jax.random.normal(k_in, (N, C), dtype=jnp.float32)
    targets = jax.random.randint(k_tgt, (N,), 0, C, dtype=jnp.int32)

    loss = jax.block_until_ready(ems_loss(inputs, targets, m=4, block_rows=8))
    ref = jax.block_until_ready(_ems_loss_ref(inputs, targets, m=4))
    assert jnp.allclose(loss, ref, rtol=1e-5, atol=1e-5), (loss, ref)

    # bf16 logits flow straight through the DMA (no wrapper upcast) and are
    # widened to f32 inside the kernel; 220 classes ~ Sketchy-ext.
    N2, C2 = 40, 220
    inputs_bf16 = jax.random.normal(k_in2, (N2, C2), dtype=jnp.float32).astype(jnp.bfloat16)
    targets2 = jax.random.randint(k_tgt2, (N2,), 0, C2, dtype=jnp.int32)
    loss2 = jax.block_until_ready(ems_loss(inputs_bf16, targets2, m=4, block_rows=16))
    ref2 = jax.block_until_ready(
        _ems_loss_ref(inputs_bf16.astype(jnp.float32), targets2, m=4))
    assert jnp.allclose(loss2, ref2, rtol=1e-4, atol=1e-4), (loss2, ref2)

    print("KERNEL_OK")
</pallas_src>

<mosaic_0001>
module attributes {stable_mosaic.version = 11 : i64} {
  func.func @_ems_loss_kernel(%arg0: i32, %arg1: memref<8x128xf32, #tpu.memory_space<vmem>>, %arg2: memref<8x1xi32, #tpu.memory_space<vmem>>, %arg3: memref<1x8x128xf32, #tpu.memory_space<vmem>>) attributes {dimension_semantics = [#tpu.dimension_semantics<parallel>], iteration_bounds = array<i64: 2>, scalar_prefetch = 0 : i64, scratch_operands = 0 : i64, tpu.core_type = #tpu.core_type<tc>, window_params = [{transform_indices = @transform_0, window_bounds = array<i64: 8, 128>}, {transform_indices = @transform_1, window_bounds = array<i64: 8, 1>}, {transform_indices = @transform_2, window_bounds = array<i64: 1, 8, 128>}]} {
    %c0 = arith.constant 0 : index
    %c0_0 = arith.constant 0 : index
    %0 = vector.load %arg1[%c0, %c0_0] : memref<8x128xf32, #tpu.memory_space<vmem>>, vector<8x128xf32>
    %c0_1 = arith.constant 0 : index
    %c0_2 = arith.constant 0 : index
    %1 = vector.load %arg2[%c0_1, %c0_2] : memref<8x1xi32, #tpu.memory_space<vmem>>, vector<8x1xi32>
    %2 = tpu.iota {dimensions = array<i32: 1>} : vector<8x128xi32>
    %3 = vector.broadcast %1 : vector<8x1xi32> to vector<8x128xi32>
    %4 = arith.cmpi eq, %2, %3 : vector<8x128xi32>
    %cst = arith.constant 4.000000e+00 : f32
    %5 = vector.broadcast %cst : f32 to vector<8x128xf32>
    %6 = arith.mulf %0, %5 : vector<8x128xf32>
    %7 = arith.select %4, %6, %0 : vector<8x128xi1>, vector<8x128xf32>
    %cst_3 = arith.constant dense<0xFF800000> : vector<8xf32>
    %8 = vector.multi_reduction <maximumf>, %7, %cst_3 [1] : vector<8x128xf32> to vector<8xf32>
    %9 = vector.shape_cast %8 : vector<8xf32> to vector<8x1xf32>
    %10 = vector.broadcast %9 : vector<8x1xf32> to vector<8x128xf32>
    %11 = arith.subf %7, %10 : vector<8x128xf32>
    %12 = math.exp %11 : vector<8x128xf32>
    %cst_4 = arith.constant dense<0.000000e+00> : vector<8xf32>
    %13 = vector.multi_reduction <add>, %12, %cst_4 [1] : vector<8x128xf32> to vector<8xf32>
    %14 = vector.shape_cast %13 : vector<8xf32> to vector<8x1xf32>
    %15 = math.log %14 : vector<8x1xf32>
    %16 = arith.addf %9, %15 : vector<8x1xf32>
    %cst_5 = arith.constant 0.000000e+00 : f32
    %17 = vector.broadcast %cst_5 : f32 to vector<8x128xf32>
    %18 = arith.select %4, %7, %17 : vector<8x128xi1>, vector<8x128xf32>
    %cst_6 = arith.constant dense<0.000000e+00> : vector<8xf32>
    %19 = vector.multi_reduction <add>, %18, %cst_6 [1] : vector<8x128xf32> to vector<8xf32>
    %20 = vector.shape_cast %19 : vector<8xf32> to vector<8x1xf32>
    %21 = arith.subf %16, %20 : vector<8x1xf32>
    %c8_i32 = arith.constant 8 : i32
    %22 = arith.muli %arg0, %c8_i32 : i32
    %23 = tpu.iota {dimensions = array<i32: 0>} : vector<8x1xi32>
    %24 = vector.broadcast %22 : i32 to vector<8x1xi32>
    %25 = arith.addi %24, %23 : vector<8x1xi32>
    %c12_i32 = arith.constant 12 : i32
    %26 = vector.broadcast %c12_i32 : i32 to vector<8x1xi32>
    %27 = arith.cmpi slt, %25, %26 : vector<8x1xi32>
    %cst_7 = arith.constant 0.000000e+00 : f32
    %28 = vector.broadcast %cst_7 : f32 to vector<8x1xf32>
    %29 = arith.select %27, %21, %28 : vector<8x1xi1>, vector<8x1xf32>
    %30 = vector.shape_cast %29 : vector<8x1xf32> to vector<1x8x1xf32>
    %cst_8 = arith.constant dense<0.000000e+00> : vector<1xf32>
    %31 = vector.multi_reduction <add>, %30, %cst_8 [1, 2] : vector<1x8x1xf32> to vector<1xf32>
    %32 = vector.shape_cast %31 : vector<1xf32> to vector<1x1x1xf32>
    %33 = vector.extract %32[0, 0, 0] : f32 from vector<1x1x1xf32>
    %34 = vector.broadcast %33 : f32 to vector<1x8x128xf32>
    %c0_9 = arith.constant 0 : index
    %c0_10 = arith.constant 0 : index
    %c0_11 = arith.constant 0 : index
    %35 = vector.load %arg3[%c0_9, %c0_10, %c0_11] : memref<1x8x128xf32, #tpu.memory_space<vmem>>, vector<1x8x128xf32>
    tpu.vector_store %arg3[%c0_9, %c0_10, %c0_11], %34 {strides = array<i32>} : memref<1x8x128xf32, #tpu.memory_space<vmem>>, vector<1x8x128xf32>,
    return
  }
  func.func @transform_0(%arg0: i32) -> (i32, i32) {
    %c0_i32 = arith.constant 0 : i32
    %c0_i32_0 = arith.constant 0 : i32
    return %arg0, %c0_i32 : i32, i32
  }
  func.func @transform_1(%arg0: i32) -> (i32, i32) {
    %c0_i32 = arith.constant 0 : i32
    %c0_i32_0 = arith.constant 0 : i32
    return %arg0, %c0_i32 : i32, i32
  }
  func.func @transform_2(%arg0: i32) -> (i32, i32, i32) {
    %c0_i32 = arith.constant 0 : i32
    %c0_i32_0 = arith.constant 0 : i32
    %c0_i32_1 = arith.constant 0 : i32
    return %arg0, %c0_i32, %c0_i32_0 : i32, i32, i32
  }
}

</mosaic_0001>

<llo_original>
// kernel: tpu_custom_call.1
$region0: #{tpu_custom_call.1}
  #allocation0 [shape = 'u32[]', space=smem, size = 0x4, offset = 0x4, fixed_abs, tag = 'smem constant byte address 0x4 - core index']
  #allocation1 [shape = 'u32[144,128]{1,0:T(1,128)}', space=vmem, size = 0x12000, scoped, tag = 'internal scratch']
  %s0 = inlined_call_operand.vmem [shape: f32[16,128], index: 0, kind: input, shape index: {}]
  %s1 = inlined_call_operand.vmem [shape: s32[16,1], index: 1, kind: input, shape index: {}]
  %s2 = inlined_call_operand.hbm [shape: f32[2,8,128], index: 2, kind: output, shape index: {}]
  %s3 = sld [smem:[#allocation0]]
  $region41: #{tpu_custom_call.1} parent=0
    _
  %s5 = ssub.s32 1, %s3
  %s6 = scalar_select 0, %s5, %s3
  $region1: #{tpu_custom_call.1} parent=0
    #allocation2 [shape = 'u8[8192]{0}', space=vmem, size = 0x2000, scoped, tag = 'output window, operand 0']
    #allocation3 [shape = 's32[2]{0}', space=sflag, size = 0x8, scoped, tag = 'scoped memory for tpu_custom_call.1']
    %7 = vsyncpa [#allocation3], 0
    %s8 = scalar_lea.sflag [#allocation3], 1
    %9 = vsyncpa %s8, 0
    loop: start=0, step=1, limit=4
    $region2: #{tpu_custom_call.1} parent=1 // loop_pre_header
      _
    $region3: #{tpu_custom_call.1} parent=1 // loop_header
      %s11 = sphi 0, %s15
      %p12 = scmp.ge.s32.totalorder %s11, 4
      %s21 = sphi 0, %s23
      %s24 = sphi 0, %s21
      %s25 = sphi 0, %s24
      %s41 = sphi 0, %s25
      %s47 = sphi 0, %s49
      %s50 = sphi 0, %s47
      %s51 = sphi 0, %s50
      %s67 = sphi 0, %s51
      %s73 = sphi 0, %s75
      %s76 = sphi 0, %s73
      %s77 = sphi 0, %s76
      %s93 = sphi 0, %s77
    $region4: #{tpu_custom_call.1} parent=1 // loop_header_branch
      %14 = sbr.rel (%p12) target = $region8
    $region5: #{tpu_custom_call.1} parent=1 // loop_body
      %s16 = ssub.s32 %s11, 1
      %s17 = ssub.s32 %s11, 2
      %s18 = sadd.s32 %s11, 1
      %s19 = ssub.s32 %s11, %s18
      %p20 = scmp.eq.s32.totalorder %s19, 0
      %s22 = sadd.s32 %s21, 1
      %s23 = scalar_select %p20, %s21, %s22
      %p26 = pneg %p20
      %p27 = scmp.eq.s32.totalorder %s11, 1
      %p28 = por %p26, %p27
      %p29 = scmp.ne.s32.totalorder %s21, %s24
      %p30 = scmp.eq.s32.totalorder %s11, 0
      %p31 = por %p29, %p30
      %p32 = scmp.ne.s32.totalorder %s21, %s24
      %p33 = scmp.eq.s32.totalorder %s16, 1
      %p34 = por %p32, %p33
      %p35 = scmp.ne.s32.totalorder %s24, %s25
      %p36 = scmp.eq.s32.totalorder %s16, 0
      %p37 = por %p35, %p36
      %p38 = scmp.ne.s32.totalorder %s24, %s25
      %p39 = scmp.eq.s32.totalorder %s17, 1
      %p40 = por %p38, %p39
      %p42 = scmp.ne.s32.totalorder %s25, %s41
      %p43 = scmp.eq.s32.totalorder %s17, 0
      %p44 = por %p42, %p43
      %s45 = ssub.s32 %s11, %s18
      %p46 = scmp.eq.s32.totalorder %s45, 0
      %s48 = sadd.s32 %s47, 1
      %s49 = scalar_select %p46, %s47, %s48
      %p52 = pneg %p46
      %p53 = scmp.eq.s32.totalorder %s11, 1
      %p54 = por %p52, %p53
      %p55 = scmp.ne.s32.totalorder %s47, %s50
      %p56 = scmp.eq.s32.totalorder %s11, 0
      %p57 = por %p55, %p56
      %p58 = scmp.ne.s32.totalorder %s47, %s50
      %p59 = scmp.eq.s32.totalorder %s16, 1
      %p60 = por %p58, %p59
      %p61 = scmp.ne.s32.totalorder %s50, %s51
      %p62 = scmp.eq.s32.totalorder %s16, 0
      %p63 = por %p61, %p62
      %p64 = scmp.ne.s32.totalorder %s50, %s51
      %p65 = scmp.eq.s32.totalorder %s17, 1
      %p66 = por %p64, %p65
      %p68 = scmp.ne.s32.totalorder %s51, %s67
      %p69 = scmp.eq.s32.totalorder %s17, 0
      %p70 = por %p68, %p69
      %s71 = ssub.s32 %s11, %s18
      %p72 = scmp.eq.s32.totalorder %s71, 0
      %s74 = sadd.s32 %s73, 1
      %s75 = scalar_select %p72, %s73, %s74
      %p78 = pneg %p72
      %p79 = scmp.eq.s32.totalorder %s11, 1
      %p80 = por %p78, %p79
      %p81 = scmp.ne.s32.totalorder %s73, %s76
      %p82 = scmp.eq.s32.totalorder %s11, 0
      %p83 = por %p81, %p82
      %p84 = scmp.ne.s32.totalorder %s73, %s76
      %p85 = scmp.eq.s32.totalorder %s16, 1
      %p86 = por %p84, %p85
      %p87 = scmp.ne.s32.totalorder %s76, %s77
      %p88 = scmp.eq.s32.totalorder %s16, 0
      %p89 = por %p87, %p88
      %p90 = scmp.ne.s32.totalorder %s76, %s77
      %p91 = scmp.eq.s32.totalorder %s17, 1
      %p92 = por %p90, %p91
      %p94 = scmp.ne.s32.totalorder %s77, %s93
      %p95 = scmp.eq.s32.totalorder %s17, 0
      %p96 = por %p94, %p95
      %p97 = scmp.le.s32.totalorder 1, %s11
      %p98 = scmp.lt.s32.totalorder %s11, 3
      %p99 = pnand %p97, %p98
      %p100 = pneg %p99
      // Predicated region
      $region9: #{tpu_custom_call.1} parent=5 // pred_check
        _
      $region10: #{tpu_custom_call.1} parent=5 // pred_check_branch
        %102 = sbr.rel (%p99) target = $region12
      $region11: #{tpu_custom_call.1} parent=5 // pred_region
        %s103 = ssub.s32 %s11, 1
      $region12: #{tpu_custom_call.1} parent=5 // pred_fallthru
        _
      %p104 = scmp.lt.s32.totalorder %s11, 2
      // Predicated region
      $region13: #{tpu_custom_call.1} parent=5 // pred_check
        %p105 = pneg %p104
      $region14: #{tpu_custom_call.1} parent=5 // pred_check_branch
        %107 = sbr.rel (%p105) target = $region16
      $region15: #{tpu_custom_call.1} parent=5 // pred_region
        // Predicated region
        $region17: #{tpu_custom_call.1} parent=15 // pred_check
          %p108 = pneg %p31
        $region18: #{tpu_custom_call.1} parent=15 // pred_check_branch
          %110 = sbr.rel (%p108) target = $region20
        $region19: #{tpu_custom_call.1} parent=15 // pred_region
          %p111 = scmp.lt.s32.totalorder %s11, 1
          %s112 = scalar_select %p111, %s11, 1
          %s113 = smul.addr %s112, 8
          %s114 = scalar_lea.vmem %s0, %s113
        $region20: #{tpu_custom_call.1} parent=15 // pred_fallthru
          _
        // Predicated region
        $region21: #{tpu_custom_call.1} parent=15 // pred_check
          %p115 = pneg %p57
        $region22: #{tpu_custom_call.1} parent=15 // pred_check_branch
          %117 = sbr.rel (%p115) target = $region24
        $region23: #{tpu_custom_call.1} parent=15 // pred_region
          %p118 = scmp.lt.s32.totalorder %s11, 1
          %s119 = scalar_select %p118, %s11, 1
          %s120 = smul.addr %s119, 8
          %s121 = scalar_lea.vmem %s1, %s120
        $region24: #{tpu_custom_call.1} parent=15 // pred_fallthru
          _
      $region16: #{tpu_custom_call.1} parent=5 // pred_fallthru
        _
      %p122 = scmp.le.s32.totalorder 1, %s11
      %p123 = scmp.lt.s32.totalorder %s11, 3
      %p124 = pnand %p122, %p123
      %p125 = pneg %p124
      // Predicated region
      $region25: #{tpu_custom_call.1} parent=5 // pred_check
        _
      $region26: #{tpu_custom_call.1} parent=5 // pred_check_branch
        %127 = sbr.rel (%p124) target = $region28
      $region27: #{tpu_custom_call.1} parent=5 // pred_region
        %s128 = ssub.s32 %s11, 1
        %p129 = scmp.lt.s32.totalorder %s16, 1
        %s130 = scalar_select %p129, %s16, 1
        %s131 = smul.addr %s130, 8
        %s132 = scalar_lea.vmem %s0, %s131
        %p133 = pneg %p37
        %p134 = pneg %p34
        %p135 = scmp.lt.s32.totalorder %s16, 1
        %s136 = scalar_select %p135, %s16, 1
        %s137 = smul.addr %s136, 8
        %s138 = scalar_lea.vmem %s1, %s137
        %p139 = pneg %p63
        %p140 = pneg %p60
        %p141 = pneg %p89
        %p142 = pneg %p86
        %s143 = sand.u32 %s76, 1
        %s144 = scalar_lea.sflag [#allocation3], %s143
        %s145 = sand.u32 %s76, 1
        %s146 = smul.addr %s145, 8
        %s147 = scalar_lea.vmem [#allocation2], %s146
        %p148 = scmp.lt.s32.totalorder %s16, 1
        %s149 = scalar_select %p148, %s16, 1
        %s150 = smul.addr %s149, 8
        %s151 = scalar_lea.vmem %s0, %s150
        %p152 = scmp.lt.s32.totalorder %s16, 1
        %s153 = scalar_select %p152, %s16, 1
        %s154 = smul.addr %s153, 8
        %s155 = scalar_lea.vmem %s1, %s154
        %v156 = vld [vmem:[%s151] sm:$0xff]
        %v157 = vld [vmem:[%s155] sm:$0xff]
        %v158 = vlaneseq
        %v159 = vand.u32 %v158, 127
        %160 = vset.pattern.permute.xlu0 0
        %161 = vperm.xlu0 %160, %v157
        %v162 = vpop.permute.xlu0 %161
        %vm163 = vcmp.eq.s32.totalorder %v159, %v162
        %v164 = vmul.f32 %v156, 4.0
        %v165 = vsel %vm163, %v164, %v156
        %166 = vmax.xlane.f32.xlu0 %v165
        %v167 = vpop.xlane.xlu0 %166
        %v168 = vsub.f32 %v165, %v167
        %v169 = vmul.f32 %v168, 1.442695
        %v170 = vpow.pop %v169
        %171 = vadd.xlane.f32.xlu0 %v170
        %v172 = vpop.xlane.xlu0 %171
        %v173 = vlog2.pop %v172
        %v174 = vmul.f32 %v173, 0.6931472
        %v175 = vadd.f32 %v167, %v174
        %v176 = vsel %vm163, %v164, 0.0
        %177 = vadd.xlane.f32.xlu0 %v176
        %v178 = vpop.xlane.xlu0 %177
        %v179 = vsub.f32 %v175, %v178
        %s180 = smul.u32 %s16, 8
        %v181 = vlaneseq
        %v182 = vshrl.u32 %v181, 7
        %v183 = vstv %s180
        %v184 = vadd.s32 %v183, %v182
        %vm185 = vcmp.lt.s32.totalorder %v184, 12
        %v186 = vsel %vm185, %v179, 0.0
        %vm187 = vcmask 7168
        %v188 = vsel %vm187, %v186, 0.0
        %189 = vadd.xlane.f32.xlu0 %v188
        %v190 = vpop.xlane.xlu0 %189
        %v191 = vrot.slane %v190, 4
        %v192 = vadd.f32 %v190, %v191
        %v193 = vrot.slane %v192, 2
        %v194 = vadd.f32 %v192, %v193
        %v195 = vrot.slane %v194, 1
        %v196 = vadd.f32 %v194, %v195
        %s197 = vtos %v196
        %v198 = vstv %s197
        %199 = vst [vmem:[%s147] sm:$0xff] %v198
        %s200 = sand.u32 %s76, 1
        %s201 = scalar_lea.sflag [#allocation3], %s200
        %s202 = sand.u32 %s76, 1
        %s203 = smul.addr %s202, 8
        %s204 = scalar_lea.vmem [#allocation2], %s203
        // Predicated region
        $region29: #{tpu_custom_call.1} parent=27 // pred_check
          %p205 = pneg %p86
        $region30: #{tpu_custom_call.1} parent=27 // pred_check_branch
          %207 = sbr.rel (%p205) target = $region32
        $region31: #{tpu_custom_call.1} parent=27 // pred_region
          %s209 = ssub.s32 128, 128
          %210 = vsyncadd %s201, %s209
          %s211 = smul.addr %s16, 128
          %s212 = scalar_lea.hbm %s2, %s211
          %s214 = sshll.u32 %s204, 4
          %s215 = int_to_ptr.vmem [resolvable:$true] %s214
          %217 = dma.vmem_to_hbm [thread:$0]  %s215, 128, %s212, %s201
        $region32: #{tpu_custom_call.1} parent=27 // pred_fallthru
          _
      $region28: #{tpu_custom_call.1} parent=5 // pred_fallthru
        _
      %p218 = scmp.le.s32.totalorder 2, %s11
      // Predicated region
      $region33: #{tpu_custom_call.1} parent=5 // pred_check
        %p219 = pneg %p218
      $region34: #{tpu_custom_call.1} parent=5 // pred_check_branch
        %221 = sbr.rel (%p219) target = $region36
      $region35: #{tpu_custom_call.1} parent=5 // pred_region
        %s222 = ssub.s32 %s11, 2
        // Predicated region
        $region37: #{tpu_custom_call.1} parent=35 // pred_check
          %p223 = pneg %p92
        $region38: #{tpu_custom_call.1} parent=35 // pred_check_branch
          %225 = sbr.rel (%p223) target = $region40
        $region39: #{tpu_custom_call.1} parent=35 // pred_region
          %s226 = sand.u32 %s77, 1
          %s227 = scalar_lea.sflag [#allocation3], %s226
          %s228 = sand.u32 %s77, 1
          %s229 = smul.addr %s228, 8
          %s230 = scalar_lea.vmem [#allocation2], %s229
          %231 = dma.done %s227, 128
        $region40: #{tpu_custom_call.1} parent=35 // pred_fallthru
          _
      $region36: #{tpu_custom_call.1} parent=5 // pred_fallthru
        _
    $region6: #{tpu_custom_call.1} parent=1 // loop_footer
      %s15 = sadd.s32 1, %s11
    $region7: #{tpu_custom_call.1} parent=1 // loop_footer_branch
      %10 = sbr.rel target = $region3
    $region8: #{tpu_custom_call.1} parent=1 // loop_exit
      _
    %232 = vsyncpa [#allocation3], 1
    %s233 = scalar_lea.sflag [#allocation3], 1
    %234 = vsyncpa %s233, 1

</llo_original>
